<compile_context>
chip_gen: v6e
topology: v6e:2x2x1
jax: 0.10.0
libtpu: 0.0.40
codegen_flags: <defaults>
</compile_context>

<pallas_src>
import jax
import jax.numpy as jnp
from jax.experimental import pallas as pl
from jax.experimental.pallas import tpu as pltpu


def _disc_kernel(x_ref, w1_ref, b1_ref, w2_ref, b2_ref, o_ref):
    # Hidden layer on the MXU: (tb, D) @ (D, 128) with f32 accumulation.
    h = jnp.dot(x_ref[...], w1_ref[...], preferred_element_type=jnp.float32)
    h = jnp.maximum(h + b1_ref[...].astype(jnp.float32), 0.0)
    # 128 -> 1 projection emitted lane-major: (1,128) . (tb,128)^T -> (1, tb).
    # Contraction over the last dims of both operands (q@k^T pattern). Using the MXU here
    # is free (the kernel is HBM-bound on the x stream) and gives a lane-dense output row,
    # avoiding tb/8 masked single-lane stores + a skinny per-step writeback.
    logits = jax.lax.dot_general(
        w2_ref[...].astype(jnp.float32), h,
        dimension_numbers=(((1,), (1,)), ((), ())),
        preferred_element_type=jnp.float32,
    ) + b2_ref[0, 0]
    o_ref[0] = jax.nn.sigmoid(logits).astype(o_ref.dtype)   # (1, tb) lane-dense store


def _round_up(n, m):
    return ((n + m - 1) // m) * m


def _vmem_capacity_bytes():
    # Per-generation VMEM capacity (128 MiB v5e/v6e, 64 MiB v7x); conservative fallback.
    try:
        return int(pltpu.get_tpu_info().vmem_capacity_bytes)
    except Exception:
        return 64 * 1024 * 1024


def discriminator_forward(x, w1, b1, w2, b2, *, block_b=4096):
    """x: (B, D) in f32 or bf16 (producer-chosen dtype; no cast is done here).
    w1: (D, 128), b1: (1, 128), w2: (128, 1), b2: (1, 1). Returns (B, 1) f32 in [0, 1]."""
    B, D = x.shape
    H = w1.shape[1]
    assert w1.shape == (D, H)
    assert b1.shape == (1, H)
    assert w2.shape == (H, 1)
    assert b2.shape == (1, 1)

    x_item = jnp.dtype(x.dtype).itemsize
    w_item = jnp.dtype(w1.dtype).itemsize
    # Sub-32-bit dtypes pack 2 (bf16) / 4 (fp8,int8) rows per sublane: keep tb aligned.
    align = {4: 8, 2: 16, 1: 32}.get(x_item, 8)

    # --- per-generation VMEM budget -> batch tile ------------------------------------
    vmem_cap = _vmem_capacity_bytes()
    vmem_limit = int(min(vmem_cap * 3 // 4, 100 * 1024 * 1024))
    resident = 2 * (D * H * w_item + 2 * H * 4)          # W1 + b1 + w2 (double-buffered)
    headroom = 2 * 1024 * 1024                            # compiler-internal scratch
    per_row = 2 * D * x_item + H * 4 + 2 * 4              # 2x x row + f32 h row + 2x out row
    avail = max(vmem_limit - resident - headroom, per_row * align)
    max_tb = int(avail // per_row)

    tb = min(block_b, max_tb, _round_up(B, align))
    tb = max(align, (tb // align) * align)
    # Prefer >= 2 batch tiles when B allows so a 2-TensorCore part (v7x) can split the
    # "parallel" grid axis; costs at most one extra ~0.35 us grid step elsewhere.
    if pl.cdiv(B, tb) == 1 and B >= 2 * align:
        tb = _round_up(pl.cdiv(B, 2), align)
    num_tiles = pl.cdiv(B, tb)

    w2_row = w2.reshape(1, H)   # (1, 128) row for the lane-major projection

    out = pl.pallas_call(
        _disc_kernel,
        out_shape=jax.ShapeDtypeStruct((num_tiles, 1, tb), jnp.float32),
        grid_spec=pltpu.PrefetchScalarGridSpec(
            num_scalar_prefetch=0,
            grid=(num_tiles,),
            in_specs=[
                pl.BlockSpec((tb, D), lambda i: (i, 0)),   # x: streamed; ragged tail block OK
                pl.BlockSpec((D, H), lambda i: (0, 0)),    # W1: VMEM-resident
                pl.BlockSpec((1, H), lambda i: (0, 0)),    # b1: VMEM-resident
                pl.BlockSpec((1, H), lambda i: (0, 0)),    # w2 row: VMEM-resident
                pl.BlockSpec(memory_space=pltpu.MemorySpace.SMEM),  # b2: SMEM scalar
            ],
            out_specs=pl.BlockSpec((1, 1, tb), lambda i: (i, 0, 0)),  # lane-dense rows
        ),
        compiler_params=pltpu.CompilerParams(
            dimension_semantics=("parallel",),
            vmem_limit_bytes=vmem_limit,
        ),
    )(x, w1, b1, w2_row, b2)

    # (num_tiles, 1, tb) -> (B, 1); tail rows of a ragged last tile are dropped.
    return out.reshape(num_tiles * tb)[:B].reshape(B, 1)


def init_discriminator_params(key, image_dimension, hidden=128):
    """Deterministic init matching PyTorch nn.Linear's default:
    U(-1/sqrt(fan_in), 1/sqrt(fan_in)) for both weight and bias."""
    k1, k2, k3, k4 = jax.random.split(key, 4)
    bound1 = 1.0 / jnp.sqrt(image_dimension)
    bound2 = 1.0 / jnp.sqrt(hidden)
    w1 = jax.random.uniform(k1, (image_dimension, hidden), jnp.float32, -bound1, bound1)
    b1 = jax.random.uniform(k2, (1, hidden), jnp.float32, -bound1, bound1)
    w2 = jax.random.uniform(k3, (hidden, 1), jnp.float32, -bound2, bound2)
    b2 = jax.random.uniform(k4, (1, 1), jnp.float32, -bound2, bound2)
    return w1, b1, w2, b2


if __name__ == "__main__":
    key = jax.random.PRNGKey(0)
    k_params, k_x = jax.random.split(key)

    batch = 8
    image_dimension = 64   # small flattened-image dimension

    w1, b1, w2, b2 = init_discriminator_params(k_params, image_dimension)
    x = jax.random.normal(k_x, (batch, image_dimension), jnp.float32)

    # f32 path — parity with the PyTorch forward.
    out = jax.block_until_ready(discriminator_forward(x, w1, b1, w2, b2))
    ref = jax.nn.sigmoid(jnp.maximum(x @ w1 + b1, 0.0) @ w2 + b2)
    assert out.shape == (batch, 1)
    assert jnp.allclose(out, ref, atol=1e-4, rtol=1e-4)

    # bf16 activations/weights provided by the producer (no wrapper-side cast in the
    # kernel wrapper itself) — looser tolerance.
    out_bf16 = jax.block_until_ready(
        discriminator_forward(x.astype(jnp.bfloat16), w1.astype(jnp.bfloat16), b1, w2, b2))
    assert out_bf16.shape == (batch, 1)
    assert jnp.allclose(out_bf16, ref, atol=5e-2, rtol=5e-2)

    # Ragged batch (B not a multiple of the tile) exercises the pad-free tail block.
    xr = jax.random.normal(k_x, (batch + 3, image_dimension), jnp.float32)
    out_r = jax.block_until_ready(discriminator_forward(xr, w1, b1, w2, b2))
    ref_r = jax.nn.sigmoid(jnp.maximum(xr @ w1 + b1, 0.0) @ w2 + b2)
    assert out_r.shape == (batch + 3, 1)
    assert jnp.allclose(out_r, ref_r, atol=1e-4, rtol=1e-4)

    print("KERNEL_OK")
</pallas_src>

<mosaic_0001>
module attributes {stable_mosaic.version = 11 : i64} {
  func.func @_disc_kernel(%arg0: i32, %arg1: memref<8x64xf32, #tpu.memory_space<vmem>>, %arg2: memref<64x128xf32, #tpu.memory_space<vmem>>, %arg3: memref<1x128xf32, #tpu.memory_space<vmem>>, %arg4: memref<1x128xf32, #tpu.memory_space<vmem>>, %arg5: memref<1x1xf32, #tpu.memory_space<smem>>, %arg6: memref<1x1x8xf32, #tpu.memory_space<vmem>>) attributes {dimension_semantics = [#tpu.dimension_semantics<parallel>], iteration_bounds = array<i64: 1>, scalar_prefetch = 0 : i64, scratch_operands = 0 : i64, tpu.core_type = #tpu.core_type<tc>, window_params = [{transform_indices = @transform_0, window_bounds = array<i64: 8, 64>}, {pipeline_mode = #tpu.pipeline_mode<synchronous>, transform_indices = @transform_1, window_bounds = array<i64: 64, 128>}, {pipeline_mode = #tpu.pipeline_mode<synchronous>, transform_indices = @transform_2, window_bounds = array<i64: 1, 128>}, {pipeline_mode = #tpu.pipeline_mode<synchronous>, transform_indices = @transform_3, window_bounds = array<i64: 1, 128>}, {transform_indices = @transform_4, window_bounds = array<i64: 1, 1>}, {transform_indices = @transform_5, window_bounds = array<i64: 1, 1, 8>}]} {
    %c0 = arith.constant 0 : index
    %c0_0 = arith.constant 0 : index
    %0 = vector.load %arg1[%c0, %c0_0] : memref<8x64xf32, #tpu.memory_space<vmem>>, vector<8x64xf32>
    %c0_1 = arith.constant 0 : index
    %c0_2 = arith.constant 0 : index
    %1 = vector.load %arg2[%c0_1, %c0_2] : memref<64x128xf32, #tpu.memory_space<vmem>>, vector<64x128xf32>
    %cst = arith.constant dense<0.000000e+00> : vector<8x128xf32>
    %2 = tpu.matmul %0, %1, %cst {dimension_numbers = #tpu.dot_dimension_numbers<[1], [0], [0], [1], [0, 0, 1, 1], [], []>} : vector<8x64xf32>, vector<64x128xf32>, vector<8x128xf32> -> vector<8x128xf32>
    %c0_3 = arith.constant 0 : index
    %c0_4 = arith.constant 0 : index
    %3 = vector.load %arg3[%c0_3, %c0_4] : memref<1x128xf32, #tpu.memory_space<vmem>>, vector<1x128xf32>
    %4 = vector.broadcast %3 : vector<1x128xf32> to vector<8x128xf32>
    %5 = arith.addf %2, %4 : vector<8x128xf32>
    %cst_5 = arith.constant 0.000000e+00 : f32
    %6 = vector.broadcast %cst_5 : f32 to vector<8x128xf32>
    %7 = arith.maximumf %5, %6 : vector<8x128xf32>
    %c0_6 = arith.constant 0 : index
    %c0_7 = arith.constant 0 : index
    %8 = vector.load %arg4[%c0_6, %c0_7] : memref<1x128xf32, #tpu.memory_space<vmem>>, vector<1x128xf32>
    %cst_8 = arith.constant dense<0.000000e+00> : vector<1x8xf32>
    %9 = tpu.matmul %8, %7, %cst_8 {dimension_numbers = #tpu.dot_dimension_numbers<[1], [1], [0], [0], [0, 0, 1, 0], [], []>} : vector<1x128xf32>, vector<8x128xf32>, vector<1x8xf32> -> vector<1x8xf32>
    %c0_9 = arith.constant 0 : index
    %c0_10 = arith.constant 0 : index
    %10 = memref.load %arg5[%c0_9, %c0_10] : memref<1x1xf32, #tpu.memory_space<smem>>
    %11 = vector.broadcast %10 : f32 to vector<1x8xf32>
    %12 = arith.addf %9, %11 : vector<1x8xf32>
    %13 = arith.negf %12 : vector<1x8xf32>
    %14 = math.exp %13 : vector<1x8xf32>
    %cst_11 = arith.constant 1.000000e+00 : f32
    %15 = vector.broadcast %cst_11 : f32 to vector<1x8xf32>
    %16 = arith.addf %15, %14 : vector<1x8xf32>
    %17 = arith.divf %15, %16 : vector<1x8xf32>
    %c0_12 = arith.constant 0 : index
    %c0_13 = arith.constant 0 : index
    %c0_14 = arith.constant 0 : index
    %18 = vector.load %arg6[%c0_12, %c0_13, %c0_14] : memref<1x1x8xf32, #tpu.memory_space<vmem>>, vector<1x1x8xf32>
    %19 = vector.shape_cast %18 : vector<1x1x8xf32> to vector<1x8xf32>
    %20 = vector.shape_cast %17 : vector<1x8xf32> to vector<1x1x8xf32>
    tpu.vector_store %arg6[%c0_12, %c0_13, %c0_14], %20 {strides = array<i32>} : memref<1x1x8xf32, #tpu.memory_space<vmem>>, vector<1x1x8xf32>,
    return
  }
  func.func @transform_0(%arg0: i32) -> (i32, i32) {
    %c0_i32 = arith.constant 0 : i32
    %c0_i32_0 = arith.constant 0 : i32
    return %arg0, %c0_i32 : i32, i32
  }
  func.func @transform_1(%arg0: i32) -> (i32, i32) {
    %c0_i32 = arith.constant 0 : i32
    %c0_i32_0 = arith.constant 0 : i32
    %c0_i32_1 = arith.constant 0 : i32
    return %c0_i32, %c0_i32_0 : i32, i32
  }
  func.func @transform_2(%arg0: i32) -> (i32, i32) {
    %c0_i32 = arith.constant 0 : i32
    %c0_i32_0 = arith.constant 0 : i32
    %c0_i32_1 = arith.constant 0 : i32
    return %c0_i32, %c0_i32_0 : i32, i32
  }
  func.func @transform_3(%arg0: i32) -> (i32, i32) {
    %c0_i32 = arith.constant 0 : i32
    %c0_i32_0 = arith.constant 0 : i32
    %c0_i32_1 = arith.constant 0 : i32
    return %c0_i32, %c0_i32_0 : i32, i32
  }
  func.func @transform_4(%arg0: i32) -> (i32, i32) {
    %c0_i32 = arith.constant 0 : i32
    %c0_i32_0 = arith.constant 0 : i32
    %c0_i32_1 = arith.constant 0 : i32
    return %c0_i32, %c0_i32_0 : i32, i32
  }
  func.func @transform_5(%arg0: i32) -> (i32, i32, i32) {
    %c0_i32 = arith.constant 0 : i32
    %c0_i32_0 = arith.constant 0 : i32
    %c0_i32_1 = arith.constant 0 : i32
    return %arg0, %c0_i32, %c0_i32_0 : i32, i32, i32
  }
}

</mosaic_0001>

<llo_original>
// kernel: tpu_custom_call.1
$region0: #{tpu_custom_call.1}
  #allocation0 [shape = 'u32[]', space=smem, size = 0x4, offset = 0x4, fixed_abs, tag = 'smem constant byte address 0x4 - core index']
  #allocation1 [shape = 'u32[144,128]{1,0:T(1,128)}', space=vmem, size = 0x12000, scoped, tag = 'internal scratch']
  #allocation2 [shape = 'f32[1,1]{1,0:T(1,128)S(6)}', space=smem, size = 0x200, scoped, tag = 'scoped memory for tpu_custom_call.1']
  %s0 = inlined_call_operand.hbm [shape: f32[8,64], index: 0, kind: input, shape index: {}]
  %s1 = inlined_call_operand.hbm [shape: f32[64,128], index: 1, kind: input, shape index: {}]
  %s2 = inlined_call_operand.vmem [shape: f32[1,128], index: 2, kind: input, shape index: {}]
  %s3 = inlined_call_operand.vmem [shape: f32[1,128], index: 3, kind: input, shape index: {}]
  %s4 = inlined_call_operand.<no memory space> [shape: f32[1,1], index: 4, kind: input, shape index: {}]
  %s5 = inlined_call_operand.hbm [shape: f32[1,1,8], index: 5, kind: output, shape index: {}]
  %s6 = sld [smem:[#allocation0]]
  $region38: #{tpu_custom_call.1} parent=0
    _
  %s8 = ssub.s32 1, %s6
  %s9 = scalar_select 0, %s8, %s6
  %10 = sst [smem:[#allocation2]] %s4
  $region1: #{tpu_custom_call.1} parent=0
    #allocation3 [shape = 'u8[4096]{0}', space=vmem, size = 0x1000, scoped, tag = 'input window, operand 0, single buffered']
    #allocation4 [shape = 's32[1]{0}', space=sflag, size = 0x4, scoped, tag = 'scoped memory for tpu_custom_call.1']
    #allocation5 [shape = 's32[1]{0}', space=sflag, size = 0x4, scoped, tag = 'scoped memory for tpu_custom_call.1']
    #allocation6 [shape = 'u8[32768]{0}', space=vmem, size = 0x8000, scoped, tag = 'input window, operand 1, single buffered']
    #allocation7 [shape = 's32[1]{0}', space=sflag, size = 0x4, scoped, tag = 'scoped memory for tpu_custom_call.1']
    #allocation8 [shape = 'u8[512]{0}', space=vmem, size = 0x400, scoped, tag = 'output window, operand 0, single buffered']
    %11 = vsyncpa [#allocation4], 0
    %12 = vsyncpa [#allocation7], 0
    %13 = vsyncpa [#allocation5], 0
    // Predicated region
    $region2: #{tpu_custom_call.1} parent=1 // pred_check
      _
    $region3: #{tpu_custom_call.1} parent=1 // pred_check_branch
      %15 = sbr.rel (0) target = $region5
    $region4: #{tpu_custom_call.1} parent=1 // pred_region
      %s17 = ssub.s32 128, 128
      %18 = vsyncadd [#allocation4], %s17
      %s20 = sshll.u32 [#allocation3], 4
      %s21 = int_to_ptr.vmem [resolvable:$true] %s20
      %23 = dma.hbm_to_vmem [thread:$0]  %s0, 128, %s21, [#allocation4]
    $region5: #{tpu_custom_call.1} parent=1 // pred_fallthru
      _
    // Predicated region
    $region6: #{tpu_custom_call.1} parent=1 // pred_check
      _
    $region7: #{tpu_custom_call.1} parent=1 // pred_check_branch
      %25 = sbr.rel (0) target = $region9
    $region8: #{tpu_custom_call.1} parent=1 // pred_region
      %s27 = ssub.s32 1024, 1024
      %28 = vsyncadd [#allocation7], %s27
      %s29 = sshll.u32 [#allocation6], 4
      %s30 = int_to_ptr.vmem [resolvable:$true] %s29
      %35 = dma.hbm_to_vmem [thread:$0]  %s1, 1024, %s30, [#allocation7], 128, 128, 8
    $region9: #{tpu_custom_call.1} parent=1 // pred_fallthru
      _
    // Predicated region
    $region10: #{tpu_custom_call.1} parent=1 // pred_check
      _
    $region11: #{tpu_custom_call.1} parent=1 // pred_check_branch
      %37 = sbr.rel (0) target = $region13
    $region12: #{tpu_custom_call.1} parent=1 // pred_region
      _
    $region13: #{tpu_custom_call.1} parent=1 // pred_fallthru
      _
    // Predicated region
    $region14: #{tpu_custom_call.1} parent=1 // pred_check
      _
    $region15: #{tpu_custom_call.1} parent=1 // pred_check_branch
      %39 = sbr.rel (0) target = $region17
    $region16: #{tpu_custom_call.1} parent=1 // pred_region
      _
    $region17: #{tpu_custom_call.1} parent=1 // pred_fallthru
      _
    // Predicated region
    $region18: #{tpu_custom_call.1} parent=1 // pred_check
      _
    $region19: #{tpu_custom_call.1} parent=1 // pred_check_branch
      %41 = sbr.rel (0) target = $region21
    $region20: #{tpu_custom_call.1} parent=1 // pred_region
      _
    $region21: #{tpu_custom_call.1} parent=1 // pred_fallthru
      _
    // Predicated region
    $region22: #{tpu_custom_call.1} parent=1 // pred_check
      _
    $region23: #{tpu_custom_call.1} parent=1 // pred_check_branch
      %43 = sbr.rel (0) target = $region25
    $region24: #{tpu_custom_call.1} parent=1 // pred_region
      %44 = dma.done [#allocation4], 128
    $region25: #{tpu_custom_call.1} parent=1 // pred_fallthru
      _
    // Predicated region
    $region26: #{tpu_custom_call.1} parent=1 // pred_check
      _
    $region27: #{tpu_custom_call.1} parent=1 // pred_check_branch
      %46 = sbr.rel (0) target = $region29
    $region28: #{tpu_custom_call.1} parent=1 // pred_region
      %47 = dma.done [#allocation7], 1024
    $region29: #{tpu_custom_call.1} parent=1 // pred_fallthru
      _
    %v48 = vld [vmem:[#allocation3] sm:$0xff]
    %v49 = vld [vmem:[#allocation6] sm:$0xff]
    %v50 = vld [vmem:[#allocation6 + $0x8] sm:$0xff]
    %v51 = vld [vmem:[#allocation6 + $0x10] sm:$0xff]
    %v52 = vld [vmem:[#allocation6 + $0x18] sm:$0xff]
    %v53 = vld [vmem:[#allocation6 + $0x20] sm:$0xff]
    %v54 = vld [vmem:[#allocation6 + $0x28] sm:$0xff]
    %v55 = vld [vmem:[#allocation6 + $0x30] sm:$0xff]
    %v56 = vld [vmem:[#allocation6 + $0x38] sm:$0xff]
    %v57 = vld [vmem:[%s2] sm:$0x1]
    %v59 = vlaneseq
    %v60 = vshrl.u32 %v59, 7
    %v61 = vsub.s32 0, %v60
    %v62 = vrot.slane %v57, %v61
    %vm64 = vcmask 523264
    %v66 = vsel %vm64, %v48, 0
    %68 = vmatprep.subr.mxu0 0.0
    %69 = vmatpush1.msra.mxu0 0.0
    %70 = vmatprep.subr.mxu0 0.0
    %71 = vmatpush1.msra.mxu0 0.0
    %72 = vmatprep.subr.mxu0 0.0
    %73 = vmatpush1.msra.mxu0 0.0
    %74 = vmatprep.subr.mxu0 0.0
    %75 = vmatpush1.msra.mxu0 0.0
    %76 = vmatprep.subr.mxu0 0.0
    %77 = vmatpush1.msra.mxu0 0.0
    %78 = vmatprep.subr.mxu0 0.0
    %79 = vmatpush1.msra.mxu0 0.0
    %80 = vmatprep.subr.mxu0 0.0
    %81 = vmatpush1.msra.mxu0 0.0
    %82 = vmatprep.subr.mxu0 0.0
    %83 = vmatpush1.msra.mxu0 0.0
    %84 = vmatprep.subr.mxu0 0.0
    %85 = vmatpush1.msra.mxu0 %v56
    %86 = vmatprep.subr.mxu0 0.0
    %87 = vmatpush1.msra.mxu0 %v55
    %88 = vmatprep.subr.mxu0 0.0
    %89 = vmatpush1.msra.mxu0 %v54
    %90 = vmatprep.subr.mxu0 0.0
    %91 = vmatpush1.msra.mxu0 %v53
    %92 = vmatprep.subr.mxu0 0.0
    %93 = vmatpush1.msra.mxu0 %v52
    %94 = vmatprep.subr.mxu0 0.0
    %95 = vmatpush1.msra.mxu0 %v51
    %96 = vmatprep.subr.mxu0 0.0
    %97 = vmatpush1.msra.mxu0 %v50
    %98 = vmatprep.subr.mxu0 0.0
    %99 = vmatpush1.msra.mxu0 %v49
    %100 = vmatprep.subr.mxu0 0.0
    %101 = vmatpush2.msra.mxu0 0.0
    %102 = vmatprep.subr.mxu0 0.0
    %103 = vmatpush2.msra.mxu0 0.0
    %104 = vmatprep.subr.mxu0 0.0
    %105 = vmatpush2.msra.mxu0 0.0
    %106 = vmatprep.subr.mxu0 0.0
    %107 = vmatpush2.msra.mxu0 0.0
    %108 = vmatprep.subr.mxu0 0.0
    %109 = vmatpush2.msra.mxu0 0.0
    %110 = vmatprep.subr.mxu0 0.0
    %111 = vmatpush2.msra.mxu0 0.0
    %112 = vmatprep.subr.mxu0 0.0
    %113 = vmatpush2.msra.mxu0 0.0
    %114 = vmatprep.subr.mxu0 0.0
    %115 = vmatpush2.msra.mxu0 0.0
    %116 = vmatprep.subr.mxu0 0.0
    %117 = vmatpush2.msra.mxu0 0.0
    %118 = vmatprep.subr.mxu0 0.0
    %119 = vmatpush2.msra.mxu0 0.0
    %120 = vmatprep.subr.mxu0 0.0
    %121 = vmatpush2.msra.mxu0 0.0
    %122 = vmatprep.subr.mxu0 0.0
    %123 = vmatpush2.msra.mxu0 0.0
    %124 = vmatprep.subr.mxu0 0.0
    %125 = vmatpush2.msra.mxu0 0.0
    %126 = vmatprep.subr.mxu0 0.0
    %127 = vmatpush2.msra.mxu0 0.0
    %128 = vmatprep.subr.mxu0 0.0
    %129 = vmatpush2.msra.mxu0 0.0
    %130 = vmatprep.subr.mxu0 0.0
    %131 = vmatpush2.msra.mxu0 0.0
    %132 = vmatprep.mubr.f32.mxu0 0.0
    %133 = vmatmul.mubr.f32.gmra.mxu0 %v66
    %v134 = vpop.f32.mrf.mxu0
    %v135 = vadd.f32 %v62, %v134
    %v136 = vpop.f32.mrf.mxu0
    %137 = vdwg.mxu0
    %v138 = vmax.f32 %v135, 0.0
    %v139 = vld [vmem:[%s3] sm:$0x1]
    %s140 = sld [smem:[#allocation2]]
    %v141 = vstv %s140
    %142 = vmatprep.subr.mxu0 0.0
    %143 = vmatpush1.xpose.msra.mxu0 0.0
    %144 = vmatprep.subr.mxu0 0.0
    %145 = vmatpush1.xpose.msra.mxu0 0.0
    %146 = vmatprep.subr.mxu0 0.0
    %147 = vmatpush1.xpose.msra.mxu0 0.0
    %148 = vmatprep.subr.mxu0 0.0
    %149 = vmatpush1.xpose.msra.mxu0 0.0
    %150 = vmatprep.subr.mxu0 0.0
    %151 = vmatpush1.xpose.msra.mxu0 0.0
    %152 = vmatprep.subr.mxu0 0.0
    %153 = vmatpush1.xpose.msra.mxu0 0.0
    %154 = vmatprep.subr.mxu0 0.0
    %155 = vmatpush1.xpose.msra.mxu0 0.0
    %156 = vmatprep.subr.mxu0 0.0
    %157 = vmatpush1.xpose.msra.mxu0 0.0
    %158 = vmatprep.subr.mxu0 0.0
    %159 = vmatpush1.xpose.msra.mxu0 0.0
    %160 = vmatprep.subr.mxu0 0.0
    %161 = vmatpush1.xpose.msra.mxu0 0.0
    %162 = vmatprep.subr.mxu0 0.0
    %163 = vmatpush1.xpose.msra.mxu0 0.0
    %164 = vmatprep.subr.mxu0 0.0
    %165 = vmatpush1.xpose.msra.mxu0 0.0
    %166 = vmatprep.subr.mxu0 0.0
    %167 = vmatpush1.xpose.msra.mxu0 0.0
    %168 = vmatprep.subr.mxu0 0.0
    %169 = vmatpush1.xpose.msra.mxu0 0.0
    %170 = vmatprep.subr.mxu0 0.0
    %171 = vmatpush1.xpose.msra.mxu0 0.0
    %172 = vmatprep.subr.mxu0 0.0
    %173 = vmatpush1.xpose.msra.mxu0 %v138
    %174 = vmatprep.subr.mxu0 0.0
    %175 = vmatpush2.xpose.msra.mxu0 0.0
    %176 = vmatprep.subr.mxu0 0.0
    %177 = vmatpush2.xpose.msra.mxu0 0.0
    %178 = vmatprep.subr.mxu0 0.0
    %179 = vmatpush2.xpose.msra.mxu0 0.0
    %180 = vmatprep.subr.mxu0 0.0
    %181 = vmatpush2.xpose.msra.mxu0 0.0
    %182 = vmatprep.subr.mxu0 0.0
    %183 = vmatpush2.xpose.msra.mxu0 0.0
    %184 = vmatprep.subr.mxu0 0.0
    %185 = vmatpush2.xpose.msra.mxu0 0.0
    %186 = vmatprep.subr.mxu0 0.0
    %187 = vmatpush2.xpose.msra.mxu0 0.0
    %188 = vmatprep.subr.mxu0 0.0
    %189 = vmatpush2.xpose.msra.mxu0 0.0
    %190 = vmatprep.subr.mxu0 0.0
    %191 = vmatpush2.xpose.msra.mxu0 0.0
    %192 = vmatprep.subr.mxu0 0.0
    %193 = vmatpush2.xpose.msra.mxu0 0.0
    %194 = vmatprep.subr.mxu0 0.0
    %195 = vmatpush2.xpose.msra.mxu0 0.0
    %196 = vmatprep.subr.mxu0 0.0
    %197 = vmatpush2.xpose.msra.mxu0 0.0
    %198 = vmatprep.subr.mxu0 0.0
    %199 = vmatpush2.xpose.msra.mxu0 0.0
    %200 = vmatprep.subr.mxu0 0.0
    %201 = vmatpush2.xpose.msra.mxu0 0.0
    %202 = vmatprep.subr.mxu0 0.0
    %203 = vmatpush2.xpose.msra.mxu0 0.0
    %204 = vmatprep.subr.mxu0 0.0
    %205 = vmatpush2.xpose.msra.mxu0 0.0
    %206 = vmatprep.mubr.f32.mxu0 0.0
    %207 = vmatmul.mubr.f32.gmra.mxu0 %v139
    %v208 = vpop.f32.mrf.mxu0
    %v209 = vadd.f32 %v141, %v208
    %v210 = vpop.f32.mrf.mxu0
    %211 = vdwg.mxu0
    %v212 = vxor.u32 %v209, 2147483648
    %v213 = vmul.f32 %v212, 1.442695
    %v214 = vpow.pop %v213
    %v215 = vadd.f32 %v214, 1.0
    %v216 = vrcp.pop %v215
    %v217 = vmul.f32 1.0, %v216
    %vm218 = vcmask 57344
    %219 = vst.msk [vmem:[#allocation8] sm:$0x1] %vm218, %v217
    // Predicated region
    $region30: #{tpu_custom_call.1} parent=1 // pred_check
      _
    $region31: #{tpu_custom_call.1} parent=1 // pred_check_branch
      %221 = sbr.rel (0) target = $region33
    $region32: #{tpu_custom_call.1} parent=1 // pred_region
      %s223 = ssub.s32 16, 16
      %224 = vsyncadd [#allocation5], %s223
      %s226 = sshll.u32 [#allocation8], 4
      %s227 = int_to_ptr.vmem [resolvable:$true] %s226
      %229 = dma.vmem_to_hbm [thread:$0]  %s227, 16, %s5, [#allocation5]
    $region33: #{tpu_custom_call.1} parent=1 // pred_fallthru
      _
    // Predicated region
    $region34: #{tpu_custom_call.1} parent=1 // pred_check
      _
    $region35: #{tpu_custom_call.1} parent=1 // pred_check_branch
      %231 = sbr.rel (0) target = $region37
    $region36: #{tpu_custom_call.1} parent=1 // pred_region
      %232 = dma.done [#allocation5], 16
    $region37: #{tpu_custom_call.1} parent=1 // pred_fallthru
      _
    %233 = vsyncpa [#allocation4], 1
    %234 = vsyncpa [#allocation7], 1
    %235 = vsyncpa [#allocation5], 1

</llo_original>
